<compile_context>
chip_gen: v7x
topology: tpu7x:2x2x1
jax: 0.10.0
libtpu: 0.0.40
codegen_flags: <defaults>
</compile_context>

<pallas_src>
import numpy as np
import jax
import jax.numpy as jnp
from jax.experimental import pallas as pl
from jax.experimental.pallas import tpu as pltpu


# ----------------------------- configuration --------------------------------
class Config:
    SLM_pixel_num = 16     # phase_size (small, synthetic)
    DMD_pixel_num = 16     # resize target
    CAM_pixel_num = 24     # input camera resolution
    num_classes = 10
    wavelength = 532e-9
    pixel_pitch = 8e-6
    distance = 0.02


LOGIT_PAD = 128            # pad detector/logit columns to a full lane group


def _round_up(x, m):
    return ((x + m - 1) // m) * m


# ------------------------------ Pallas kernel --------------------------------
def d2nn_kernel(x_ref, r_ref, wprop_ref, det_ref, alpha_ref, beta_ref,
                logits_ref, cam_ref):
    N2 = cam_ref.shape[-1]

    # --- 1. bilinear resize via composite operator (bf16 MXU, f32 accumulate) ---
    xcam = jnp.dot(x_ref[...], r_ref[...],
                   preferred_element_type=jnp.float32)             # [BT, N2] f32

    # --- 2. UniformLayer: per-sample normalization to [0, 1] (exact recip) -----
    mx = jnp.max(xcam, axis=-1, keepdims=True)                     # [BT, 1]
    xuni = xcam / (mx + 1e-8)

    # --- 3. BinarizationLayer: smooth sigmoid binarization (f32 VPU/EUP) -------
    alpha = alpha_ref[0, 0]
    beta = beta_ref[0, 0]
    mean = jnp.mean(xuni, axis=-1, keepdims=True)
    xbin = jax.nn.sigmoid(alpha * (xuni - beta * mean))            # [BT, N2]

    # --- 4+5. SLM modulation + propagation fused into ONE [N2, 2*N2] matmul ----
    uc = jnp.dot(xbin.astype(jnp.bfloat16), wprop_ref[...],
                 preferred_element_type=jnp.float32)               # [BT, 2*N2]
    ur = uc[:, :N2]
    ui = uc[:, N2:]

    # --- 6. camera intensity + detector pooling as MXU matmul ------------------
    inten = ur * ur + ui * ui                                      # [BT, N2] f32
    cam_ref[...] = inten
    logits_ref[...] = jnp.dot(inten.astype(jnp.bfloat16), det_ref[...],
                              preferred_element_type=jnp.float32)  # [BT, 128]


# ------------------------- host-side operator precompute ---------------------
def bilinear_matrix(n_out, n_in):
    """Row-interp matrix for bilinear resize (align_corners=False)."""
    scale = n_in / n_out
    R = np.zeros((n_out, n_in), np.float32)
    for i in range(n_out):
        src = (i + 0.5) * scale - 0.5
        i0 = int(np.floor(src))
        w = src - i0
        i0c = min(max(i0, 0), n_in - 1)
        i1c = min(max(i0 + 1, 0), n_in - 1)
        R[i, i0c] += 1.0 - w
        R[i, i1c] += w
    return R


def make_resize_operator(N, Hin, Win):
    """Composite resize operator: xcam_flat = x_flat @ R, R in [Hin*Win, N*N]."""
    Rh = bilinear_matrix(N, Hin)                    # [N, Hin]
    Rw = bilinear_matrix(N, Win)                    # [N, Win]
    # row-major vec(Rh @ X @ Rw^T) = kron(Rh, Rw) @ vec(X)
    R_op = np.kron(Rh, Rw)                          # [N*N, Hin*Win]
    return np.ascontiguousarray(R_op.T).astype(np.float32)


def make_propagation_operator(N, lam, dx, z):
    """Composite angular-spectrum operator M^T (real, imag) with
       vec(out) = M @ vec(field), M = kron(IF,IF) @ diag(vec(H)) @ kron(F,F)."""
    j, k = np.meshgrid(np.arange(N), np.arange(N), indexing="ij")
    F = np.exp(-2j * np.pi * j * k / N)             # forward DFT (symmetric)
    IF = np.conj(F) / N                             # inverse DFT (symmetric)
    fx = np.fft.fftfreq(N, d=dx)
    FX, FY = np.meshgrid(fx, fx, indexing="ij")
    arg = 1.0 - (lam * FX) ** 2 - (lam * FY) ** 2
    mask = arg > 0
    kz = (2.0 * np.pi / lam) * np.sqrt(np.maximum(arg, 0.0))
    H = np.exp(1j * kz * z) * mask                  # transfer function
    M = np.kron(IF, IF) @ (H.reshape(-1)[:, None] * np.kron(F, F))   # [N*N, N*N]
    MT = np.ascontiguousarray(M.T)
    return MT.real.astype(np.float32), MT.imag.astype(np.float32)


def make_detector_masks(N, num_classes):
    det = np.zeros((num_classes, N, N), np.float32)
    rows, cols, sz = [4, 10], [1, 4, 7, 10, 13], 2
    for c in range(num_classes):
        r0, c0 = rows[c // 5], cols[c % 5]
        det[c, r0:r0 + sz, c0:c0 + sz] = 1.0
    return det


def make_detector_matrix(N, num_classes, pad_to=LOGIT_PAD):
    det = make_detector_masks(N, num_classes)       # [C, N, N]
    D = det.reshape(num_classes, N * N).T           # [N*N, C]
    Dp = np.zeros((N * N, pad_to), np.float32)
    Dp[:, :num_classes] = D
    return Dp


def init_params(key, cfg):
    k1, k2, k3 = jax.random.split(key, 3)
    ps = cfg.SLM_pixel_num
    real3 = 0.7071 * (jax.random.uniform(k1, (ps, ps), jnp.float32) - 0.5) * 2.0
    imag3 = 0.7071 * (jax.random.uniform(k2, (ps, ps), jnp.float32) - 0.5) * 2.0
    alpha2 = 1200.0 * (jax.random.uniform(k3, (1, 1), jnp.float32) + 1.0)
    beta2 = jnp.ones((1, 1), jnp.float32)
    return real3, imag3, alpha2, beta2


# ------------------------------ JAX glue / wrapper ----------------------------
def model_forward(cfg, xDMD1, params):
    """state='train' forward: returns (class logits [B, num_classes], xCAM3 [B,N,N])."""
    real3, imag3, alpha2, beta2 = params
    B, C, Hin, Win = xDMD1.shape
    assert C == 1
    N, Ccls = cfg.DMD_pixel_num, cfg.num_classes
    N2 = N * N
    HW = Hin * Win
    HWp = _round_up(HW, 128)                        # lane-dense K for resize matmul

    # resize operator, K-padded with zero rows, bf16 MXU operand
    R_np = make_resize_operator(N, Hin, Win)                        # [HW, N2]
    R_pad = np.zeros((HWp, N2), np.float32)
    R_pad[:HW] = R_np
    R = jnp.asarray(R_pad, dtype=jnp.bfloat16)

    # SLM diag folded into propagation operator; complex product fused -> [N2, 2*N2]
    MrT_np, MiT_np = make_propagation_operator(
        N, cfg.wavelength, cfg.pixel_pitch, cfg.distance)
    MrT = jnp.asarray(MrT_np)
    MiT = jnp.asarray(MiT_np)
    rvec = real3.reshape(N2, 1).astype(jnp.float32)
    ivec = imag3.reshape(N2, 1).astype(jnp.float32)
    Wr = rvec * MrT - ivec * MiT                                    # diag(r)MrT - diag(i)MiT
    Wi = rvec * MiT + ivec * MrT                                    # diag(r)MiT + diag(i)MrT
    Wprop = jnp.concatenate([Wr, Wi], axis=1).astype(jnp.bfloat16)  # [N2, 2*N2]

    Dmat = jnp.asarray(make_detector_matrix(N, Ccls), dtype=jnp.bfloat16)  # [N2, 128]

    # flatten batch, pad K to HWp, pad batch rows to a clean tile multiple
    x_flat = xDMD1[:, 0, :, :].reshape(B, HW).astype(jnp.float32)
    B8 = _round_up(B, 8)
    if B8 <= 256:
        BT = B8
    else:
        BT = 256
        for cand in (512, 768, 1024):               # grow BT but keep >=2 grid steps
            if B8 >= 2 * cand:                      # (v7x megacore sharding)
                BT = cand
    B_pad = _round_up(B8, BT)
    x_flat = jnp.pad(x_flat, ((0, B_pad - B), (0, HWp - HW))).astype(jnp.bfloat16)

    const2d = lambda shape: pl.BlockSpec(shape, lambda i: (0, 0))
    grid_spec = pltpu.PrefetchScalarGridSpec(
        num_scalar_prefetch=0,
        grid=(B_pad // BT,),
        in_specs=[
            pl.BlockSpec((BT, HWp), lambda i: (i, 0)),              # x_flat (bf16)
            const2d((HWp, N2)),                                     # R (bf16, const idx)
            const2d((N2, 2 * N2)),                                  # Wprop (bf16, const idx)
            const2d((N2, LOGIT_PAD)),                               # detector matrix (bf16)
            pl.BlockSpec(memory_space=pltpu.MemorySpace.SMEM),      # alpha2 (scalar path)
            pl.BlockSpec(memory_space=pltpu.MemorySpace.SMEM),      # beta2  (scalar path)
        ],
        out_specs=[
            pl.BlockSpec((BT, LOGIT_PAD), lambda i: (i, 0)),        # padded logits
            pl.BlockSpec((BT, N2), lambda i: (i, 0)),               # cam intensity
        ],
    )

    logits_pad, cam_flat = pl.pallas_call(
        d2nn_kernel,
        out_shape=(jax.ShapeDtypeStruct((B_pad, LOGIT_PAD), jnp.float32),
                   jax.ShapeDtypeStruct((B_pad, N2), jnp.float32)),
        grid_spec=grid_spec,
        compiler_params=pltpu.CompilerParams(
            dimension_semantics=("parallel",)),
    )(x_flat, R, Wprop, Dmat,
      alpha2.astype(jnp.float32), beta2.astype(jnp.float32))

    xresult = logits_pad[:B, :Ccls]                                 # [B, num_classes]
    xCAM3 = cam_flat[:B].reshape(B, N, N)
    return xresult, xCAM3


if __name__ == "__main__":
    cfg = Config()
    key = jax.random.PRNGKey(0)
    k_in, k_par = jax.random.split(key)

    B = 2
    xDMD1 = jax.random.uniform(
        k_in, (B, 1, cfg.CAM_pixel_num, cfg.CAM_pixel_num), jnp.float32)
    params = init_params(k_par, cfg)

    xresult, xCAM3 = model_forward(cfg, xDMD1, params)
    xresult = jax.block_until_ready(xresult)
    xCAM3 = jax.block_until_ready(xCAM3)

    assert xresult.shape == (B, cfg.num_classes)
    assert xCAM3.shape == (B, cfg.DMD_pixel_num, cfg.DMD_pixel_num)
    assert bool(jnp.all(jnp.isfinite(xresult)))
    assert bool(jnp.all(jnp.isfinite(xCAM3)))
    print("KERNEL_OK")
</pallas_src>

<mosaic_0001>
module attributes {stable_mosaic.version = 11 : i64} {
  func.func @d2nn_kernel(%arg0: i32, %arg1: memref<8x640xbf16, #tpu.memory_space<vmem>>, %arg2: memref<640x256xbf16, #tpu.memory_space<vmem>>, %arg3: memref<256x512xbf16, #tpu.memory_space<vmem>>, %arg4: memref<256x128xbf16, #tpu.memory_space<vmem>>, %arg5: memref<1x1xf32, #tpu.memory_space<smem>>, %arg6: memref<1x1xf32, #tpu.memory_space<smem>>, %arg7: memref<8x128xf32, #tpu.memory_space<vmem>>, %arg8: memref<8x256xf32, #tpu.memory_space<vmem>>) attributes {dimension_semantics = [#tpu.dimension_semantics<parallel>], iteration_bounds = array<i64: 1>, scalar_prefetch = 0 : i64, scratch_operands = 0 : i64, tpu.core_type = #tpu.core_type<tc>, window_params = [{transform_indices = @transform_0, window_bounds = array<i64: 8, 640>}, {pipeline_mode = #tpu.pipeline_mode<synchronous>, transform_indices = @transform_1, window_bounds = array<i64: 640, 256>}, {pipeline_mode = #tpu.pipeline_mode<synchronous>, transform_indices = @transform_2, window_bounds = array<i64: 256, 512>}, {pipeline_mode = #tpu.pipeline_mode<synchronous>, transform_indices = @transform_3, window_bounds = array<i64: 256, 128>}, {transform_indices = @transform_4, window_bounds = array<i64: 1, 1>}, {transform_indices = @transform_5, window_bounds = array<i64: 1, 1>}, {transform_indices = @transform_6, window_bounds = array<i64: 8, 128>}, {transform_indices = @transform_7, window_bounds = array<i64: 8, 256>}]} {
    %c0 = arith.constant 0 : index
    %c0_0 = arith.constant 0 : index
    %0 = vector.load %arg1[%c0, %c0_0] : memref<8x640xbf16, #tpu.memory_space<vmem>>, vector<8x640xbf16>
    %c0_1 = arith.constant 0 : index
    %c0_2 = arith.constant 0 : index
    %1 = vector.load %arg2[%c0_1, %c0_2] : memref<640x256xbf16, #tpu.memory_space<vmem>>, vector<640x256xbf16>
    %cst = arith.constant dense<0.000000e+00> : vector<8x256xf32>
    %2 = tpu.matmul %0, %1, %cst {dimension_numbers = #tpu.dot_dimension_numbers<[1], [0], [0], [1], [0, 0, 1, 1], [], []>} : vector<8x640xbf16>, vector<640x256xbf16>, vector<8x256xf32> -> vector<8x256xf32>
    %cst_3 = arith.constant dense<0xFF800000> : vector<8xf32>
    %3 = vector.multi_reduction <maximumf>, %2, %cst_3 [1] : vector<8x256xf32> to vector<8xf32>
    %4 = vector.shape_cast %3 : vector<8xf32> to vector<8x1xf32>
    %cst_4 = arith.constant 9.99999993E-9 : f32
    %5 = vector.broadcast %cst_4 : f32 to vector<8x1xf32>
    %6 = arith.addf %4, %5 : vector<8x1xf32>
    %7 = vector.broadcast %6 : vector<8x1xf32> to vector<8x256xf32>
    %8 = arith.divf %2, %7 : vector<8x256xf32>
    %c0_5 = arith.constant 0 : index
    %c0_6 = arith.constant 0 : index
    %9 = memref.load %arg5[%c0_5, %c0_6] : memref<1x1xf32, #tpu.memory_space<smem>>
    %c0_7 = arith.constant 0 : index
    %c0_8 = arith.constant 0 : index
    %10 = memref.load %arg6[%c0_7, %c0_8] : memref<1x1xf32, #tpu.memory_space<smem>>
    %cst_9 = arith.constant dense<0.000000e+00> : vector<8xf32>
    %11 = vector.multi_reduction <add>, %8, %cst_9 [1] : vector<8x256xf32> to vector<8xf32>
    %12 = vector.shape_cast %11 : vector<8xf32> to vector<8x1xf32>
    %cst_10 = arith.constant 2.560000e+02 : f32
    %13 = vector.broadcast %cst_10 : f32 to vector<8x1xf32>
    %14 = arith.divf %12, %13 : vector<8x1xf32>
    %15 = vector.broadcast %10 : f32 to vector<8x1xf32>
    %16 = arith.mulf %15, %14 : vector<8x1xf32>
    %17 = vector.broadcast %16 : vector<8x1xf32> to vector<8x256xf32>
    %18 = arith.subf %8, %17 : vector<8x256xf32>
    %19 = vector.broadcast %9 : f32 to vector<8x256xf32>
    %20 = arith.mulf %19, %18 : vector<8x256xf32>
    %21 = arith.negf %20 : vector<8x256xf32>
    %22 = math.exp %21 : vector<8x256xf32>
    %cst_11 = arith.constant 1.000000e+00 : f32
    %23 = vector.broadcast %cst_11 : f32 to vector<8x256xf32>
    %24 = arith.addf %23, %22 : vector<8x256xf32>
    %25 = arith.divf %23, %24 : vector<8x256xf32>
    %26 = arith.truncf %25 : vector<8x256xf32> to vector<8x256xbf16>
    %c0_12 = arith.constant 0 : index
    %c0_13 = arith.constant 0 : index
    %27 = vector.load %arg3[%c0_12, %c0_13] : memref<256x512xbf16, #tpu.memory_space<vmem>>, vector<256x512xbf16>
    %cst_14 = arith.constant dense<0.000000e+00> : vector<8x512xf32>
    %28 = tpu.matmul %26, %27, %cst_14 {dimension_numbers = #tpu.dot_dimension_numbers<[1], [0], [0], [1], [0, 0, 1, 1], [], []>} : vector<8x256xbf16>, vector<256x512xbf16>, vector<8x512xf32> -> vector<8x512xf32>
    %29 = vector.extract_strided_slice %28 {offsets = [0, 0], sizes = [8, 256], strides = [1, 1]} : vector<8x512xf32> to vector<8x256xf32>
    %30 = vector.extract_strided_slice %28 {offsets = [0, 256], sizes = [8, 256], strides = [1, 1]} : vector<8x512xf32> to vector<8x256xf32>
    %31 = arith.mulf %29, %29 : vector<8x256xf32>
    %32 = arith.mulf %30, %30 : vector<8x256xf32>
    %33 = arith.addf %31, %32 : vector<8x256xf32>
    %c0_15 = arith.constant 0 : index
    %c0_16 = arith.constant 0 : index
    %34 = vector.load %arg8[%c0_15, %c0_16] : memref<8x256xf32, #tpu.memory_space<vmem>>, vector<8x256xf32>
    tpu.vector_store %arg8[%c0_15, %c0_16], %33 {strides = array<i32>} : memref<8x256xf32, #tpu.memory_space<vmem>>, vector<8x256xf32>,
    %35 = arith.truncf %33 : vector<8x256xf32> to vector<8x256xbf16>
    %c0_17 = arith.constant 0 : index
    %c0_18 = arith.constant 0 : index
    %36 = vector.load %arg4[%c0_17, %c0_18] : memref<256x128xbf16, #tpu.memory_space<vmem>>, vector<256x128xbf16>
    %cst_19 = arith.constant dense<0.000000e+00> : vector<8x128xf32>
    %37 = tpu.matmul %35, %36, %cst_19 {dimension_numbers = #tpu.dot_dimension_numbers<[1], [0], [0], [1], [0, 0, 1, 1], [], []>} : vector<8x256xbf16>, vector<256x128xbf16>, vector<8x128xf32> -> vector<8x128xf32>
    %c0_20 = arith.constant 0 : index
    %c0_21 = arith.constant 0 : index
    %38 = vector.load %arg7[%c0_20, %c0_21] : memref<8x128xf32, #tpu.memory_space<vmem>>, vector<8x128xf32>
    tpu.vector_store %arg7[%c0_20, %c0_21], %37 {strides = array<i32>} : memref<8x128xf32, #tpu.memory_space<vmem>>, vector<8x128xf32>,
    return
  }
  func.func @transform_0(%arg0: i32) -> (i32, i32) {
    %c0_i32 = arith.constant 0 : i32
    %c0_i32_0 = arith.constant 0 : i32
    return %arg0, %c0_i32 : i32, i32
  }
  func.func @transform_1(%arg0: i32) -> (i32, i32) {
    %c0_i32 = arith.constant 0 : i32
    %c0_i32_0 = arith.constant 0 : i32
    %c0_i32_1 = arith.constant 0 : i32
    return %c0_i32, %c0_i32_0 : i32, i32
  }
  func.func @transform_2(%arg0: i32) -> (i32, i32) {
    %c0_i32 = arith.constant 0 : i32
    %c0_i32_0 = arith.constant 0 : i32
    %c0_i32_1 = arith.constant 0 : i32
    return %c0_i32, %c0_i32_0 : i32, i32
  }
  func.func @transform_3(%arg0: i32) -> (i32, i32) {
    %c0_i32 = arith.constant 0 : i32
    %c0_i32_0 = arith.constant 0 : i32
    %c0_i32_1 = arith.constant 0 : i32
    return %c0_i32, %c0_i32_0 : i32, i32
  }
  func.func @transform_4(%arg0: i32) -> (i32, i32) {
    %c0_i32 = arith.constant 0 : i32
    %c0_i32_0 = arith.constant 0 : i32
    %c0_i32_1 = arith.constant 0 : i32
    return %c0_i32, %c0_i32_0 : i32, i32
  }
  func.func @transform_5(%arg0: i32) -> (i32, i32) {
    %c0_i32 = arith.constant 0 : i32
    %c0_i32_0 = arith.constant 0 : i32
    %c0_i32_1 = arith.constant 0 : i32
    return %c0_i32, %c0_i32_0 : i32, i32
  }
  func.func @transform_6(%arg0: i32) -> (i32, i32) {
    %c0_i32 = arith.constant 0 : i32
    %c0_i32_0 = arith.constant 0 : i32
    return %arg0, %c0_i32 : i32, i32
  }
  func.func @transform_7(%arg0: i32) -> (i32, i32) {
    %c0_i32 = arith.constant 0 : i32
    %c0_i32_0 = arith.constant 0 : i32
    return %arg0, %c0_i32 : i32, i32
  }
}

</mosaic_0001>

<llo_original>
// kernel: tpu_custom_call.1
$region0: #{tpu_custom_call.1}
  #allocation0 [shape = 'u32[]', space=smem, size = 0x4, offset = 0x4, fixed_abs, tag = 'smem constant byte address 0x4 - core index']
  #allocation1 [shape = 'u32[144,128]{1,0:T(1,128)}', space=vmem, size = 0x12000, scoped, tag = 'internal scratch']
  #allocation2 [shape = 'f32[1,1]{1,0:T(1,128)S(6)}', space=smem, size = 0x200, scoped, tag = 'scoped memory for tpu_custom_call.1']
  #allocation3 [shape = 'f32[1,1]{1,0:T(1,128)S(6)}', space=smem, size = 0x200, scoped, tag = 'scoped memory for tpu_custom_call.1']
  %s0 = inlined_call_operand.hbm [shape: bf16[8,640], index: 0, kind: input, shape index: {}]
  %s1 = inlined_call_operand.hbm [shape: bf16[640,256], index: 1, kind: input, shape index: {}]
  %s2 = inlined_call_operand.hbm [shape: bf16[256,512], index: 2, kind: input, shape index: {}]
  %s3 = inlined_call_operand.hbm [shape: bf16[256,128], index: 3, kind: input, shape index: {}]
  %s4 = inlined_call_operand.<no memory space> [shape: f32[1,1], index: 4, kind: input, shape index: {}]
  %s5 = inlined_call_operand.<no memory space> [shape: f32[1,1], index: 5, kind: input, shape index: {}]
  %s6 = inlined_call_operand.hbm [shape: f32[8,128], index: 6, kind: output, shape index: {0}]
  %s7 = inlined_call_operand.hbm [shape: f32[8,256], index: 7, kind: output, shape index: {1}]
  %8 = xla_tuple %s6, %s7
  %s9 = sld [smem:[#allocation0]]
  $region58: #{tpu_custom_call.1} parent=0
    _
  %s11 = ssub.s32 1, %s9
  %s12 = scalar_select 0, %s11, %s9
  %13 = sst [smem:[#allocation2]] %s4
  %14 = sst [smem:[#allocation3]] %s5
  $region1: #{tpu_custom_call.1} parent=0
    #allocation4 [shape = 'u8[10240]{0}', space=vmem, size = 0x2800, scoped, tag = 'input window, operand 0, single buffered']
    #allocation5 [shape = 's32[1]{0}', space=sflag, size = 0x4, scoped, tag = 'scoped memory for tpu_custom_call.1']
    #allocation6 [shape = 's32[1]{0}', space=sflag, size = 0x4, scoped, tag = 'scoped memory for tpu_custom_call.1']
    #allocation7 [shape = 'u8[327680]{0}', space=vmem, size = 0x50000, scoped, tag = 'input window, operand 1, single buffered']
    #allocation8 [shape = 's32[1]{0}', space=sflag, size = 0x4, scoped, tag = 'scoped memory for tpu_custom_call.1']
    #allocation9 [shape = 'u8[262144]{0}', space=vmem, size = 0x40000, scoped, tag = 'input window, operand 2, single buffered']
    #allocation10 [shape = 'u8[65536]{0}', space=vmem, size = 0x10000, scoped, tag = 'input window, operand 3, single buffered']
    #allocation11 [shape = 's32[1]{0}', space=sflag, size = 0x4, scoped, tag = 'scoped memory for tpu_custom_call.1']
    #allocation12 [shape = 'u8[4096]{0}', space=vmem, size = 0x1000, scoped, tag = 'output window, operand 0, single buffered']
    #allocation13 [shape = 'u8[8192]{0}', space=vmem, size = 0x2000, scoped, tag = 'output window, operand 1, single buffered']
    #allocation14 [shape = 's32[1]{0}', space=sflag, size = 0x4, scoped, tag = 'scoped memory for tpu_custom_call.1']
    %15 = vsyncpa [#allocation5], 0
    %16 = vsyncpa [#allocation8], 0
    %17 = vsyncpa [#allocation11], 0
    %18 = vsyncpa [#allocation6], 0
    %19 = vsyncpa [#allocation14], 0
    // Predicated region
    $region2: #{tpu_custom_call.1} parent=1 // pred_check
      _
    $region3: #{tpu_custom_call.1} parent=1 // pred_check_branch
      %21 = sbr.rel (0) target = $region5
    $region4: #{tpu_custom_call.1} parent=1 // pred_region
      %s23 = ssub.s32 320, 320
      %24 = vsyncadd [#allocation5], %s23
      %s26 = sshll.u32 [#allocation4], 4
      %s27 = int_to_ptr.vmem [resolvable:$true] %s26
      %29 = dma.hbm_to_vmem [thread:$0]  %s0, 320, %s27, [#allocation5]
    $region5: #{tpu_custom_call.1} parent=1 // pred_fallthru
      _
    // Predicated region
    $region6: #{tpu_custom_call.1} parent=1 // pred_check
      _
    $region7: #{tpu_custom_call.1} parent=1 // pred_check_branch
      %31 = sbr.rel (0) target = $region9
    $region8: #{tpu_custom_call.1} parent=1 // pred_region
      %s33 = ssub.s32 10240, 10240
      %34 = vsyncadd [#allocation8], %s33
      %s35 = sshll.u32 [#allocation7], 4
      %s36 = int_to_ptr.vmem [resolvable:$true] %s35
      %41 = dma.hbm_to_vmem [thread:$0]  %s1, 10240, %s36, [#allocation8], 128, 128, 8
    $region9: #{tpu_custom_call.1} parent=1 // pred_fallthru
      _
    // Predicated region
    $region10: #{tpu_custom_call.1} parent=1 // pred_check
      _
    $region11: #{tpu_custom_call.1} parent=1 // pred_check_branch
      %43 = sbr.rel (0) target = $region13
    $region12: #{tpu_custom_call.1} parent=1 // pred_region
      %s45 = ssub.s32 8192, 8192
      %46 = vsyncadd [#allocation8], %s45
      %s47 = sshll.u32 [#allocation9], 4
      %s48 = int_to_ptr.vmem [resolvable:$true] %s47
      %53 = dma.hbm_to_vmem [thread:$0]  %s2, 8192, %s48, [#allocation8], 256, 256, 16
    $region13: #{tpu_custom_call.1} parent=1 // pred_fallthru
      _
    // Predicated region
    $region14: #{tpu_custom_call.1} parent=1 // pred_check
      _
    $region15: #{tpu_custom_call.1} parent=1 // pred_check_branch
      %55 = sbr.rel (0) target = $region17
    $region16: #{tpu_custom_call.1} parent=1 // pred_region
      %s57 = ssub.s32 2048, 2048
      %58 = vsyncadd [#allocation11], %s57
      %s59 = sshll.u32 [#allocation10], 4
      %s60 = int_to_ptr.vmem [resolvable:$true] %s59
      %65 = dma.hbm_to_vmem [thread:$0]  %s3, 2048, %s60, [#allocation11], 64, 64, 4
    $region17: #{tpu_custom_call.1} parent=1 // pred_fallthru
      _
    // Predicated region
    $region18: #{tpu_custom_call.1} parent=1 // pred_check
      _
    $region19: #{tpu_custom_call.1} parent=1 // pred_check_branch
      %67 = sbr.rel (0) target = $region21
    $region20: #{tpu_custom_call.1} parent=1 // pred_region
      _
    $region21: #{tpu_custom_call.1} parent=1 // pred_fallthru
      _
    // Predicated region
    $region22: #{tpu_custom_call.1} parent=1 // pred_check
      _
    $region23: #{tpu_custom_call.1} parent=1 // pred_check_branch
      %69 = sbr.rel (0) target = $region25
    $region24: #{tpu_custom_call.1} parent=1 // pred_region
      _
    $region25: #{tpu_custom_call.1} parent=1 // pred_fallthru
      _
    // Predicated region
    $region26: #{tpu_custom_call.1} parent=1 // pred_check
      _
    $region27: #{tpu_custom_call.1} parent=1 // pred_check_branch
      %71 = sbr.rel (0) target = $region29
    $region28: #{tpu_custom_call.1} parent=1 // pred_region
      %72 = dma.done [#allocation5], 320
    $region29: #{tpu_custom_call.1} parent=1 // pred_fallthru
      _
    // Predicated region
    $region30: #{tpu_custom_call.1} parent=1 // pred_check
      _
    $region31: #{tpu_custom_call.1} parent=1 // pred_check_branch
      %74 = sbr.rel (0) target = $region33
    $region32: #{tpu_custom_call.1} parent=1 // pred_region
      %75 = dma.done [#allocation8], 10240
    $region33: #{tpu_custom_call.1} parent=1 // pred_fallthru
      _
    // Predicated region
    $region34: #{tpu_custom_call.1} parent=1 // pred_check
      _
    $region35: #{tpu_custom_call.1} parent=1 // pred_check_branch
      %77 = sbr.rel (0) target = $region37
    $region36: #{tpu_custom_call.1} parent=1 // pred_region
      %78 = dma.done [#allocation8], 8192
    $region37: #{tpu_custom_call.1} parent=1 // pred_fallthru
      _
    // Predicated region
    $region38: #{tpu_custom_call.1} parent=1 // pred_check
      _
    $region39: #{tpu_custom_call.1} parent=1 // pred_check_branch
      %80 = sbr.rel (0) target = $region41
    $region40: #{tpu_custom_call.1} parent=1 // pred_region
      %81 = dma.done [#allocation11], 2048
    $region41: #{tpu_custom_call.1} parent=1 // pred_fallthru
      _
    %v83 = vld [vmem:[#allocation4] sm:$0xff]
    %v84 = vld [vmem:[#allocation4 + $0x8] sm:$0xff]
    %v85 = vld [vmem:[#allocation4 + $0x10] sm:$0xf]
    %v86 = vld [vmem:[#allocation7] sm:$0xff]
    %v87 = vld [vmem:[#allocation7 + $0x8] sm:$0xff]
    %v88 = vld [vmem:[#allocation7 + $0x10] sm:$0xff]
    %v89 = vld [vmem:[#allocation7 + $0x18] sm:$0xff]
    %v90 = vld [vmem:[#allocation7 + $0x20] sm:$0xff]
    %v91 = vld [vmem:[#allocation7 + $0x28] sm:$0xff]
    %v92 = vld [vmem:[#allocation7 + $0x30] sm:$0xff]
    %v93 = vld [vmem:[#allocation7 + $0x38] sm:$0xff]
    %v94 = vld [vmem:[#allocation7 + $0x40] sm:$0xff]
    %v95 = vld [vmem:[#allocation7 + $0x48] sm:$0xff]
    %v96 = vld [vmem:[#allocation7 + $0x50] sm:$0xff]
    %v97 = vld [vmem:[#allocation7 + $0x58] sm:$0xff]
    %v98 = vld [vmem:[#allocation7 + $0x60] sm:$0xff]
    %v99 = vld [vmem:[#allocation7 + $0x68] sm:$0xff]
    %v100 = vld [vmem:[#allocation7 + $0x70] sm:$0xff]
    %v101 = vld [vmem:[#allocation7 + $0x78] sm:$0xff]
    %v102 = vld [vmem:[#allocation7 + $0x80] sm:$0xff]
    %v103 = vld [vmem:[#allocation7 + $0x88] sm:$0xff]
    %v104 = vld [vmem:[#allocation7 + $0x90] sm:$0xff]
    %v105 = vld [vmem:[#allocation7 + $0x98] sm:$0xff]
    %v106 = vld [vmem:[#allocation7 + $0xa0] sm:$0xff]
    %v107 = vld [vmem:[#allocation7 + $0xa8] sm:$0xff]
    %v108 = vld [vmem:[#allocation7 + $0xb0] sm:$0xff]
    %v109 = vld [vmem:[#allocation7 + $0xb8] sm:$0xff]
    %v110 = vld [vmem:[#allocation7 + $0xc0] sm:$0xff]
    %v111 = vld [vmem:[#allocation7 + $0xc8] sm:$0xff]
    %v112 = vld [vmem:[#allocation7 + $0xd0] sm:$0xff]
    %v113 = vld [vmem:[#allocation7 + $0xd8] sm:$0xff]
    %v114 = vld [vmem:[#allocation7 + $0xe0] sm:$0xff]
    %v115 = vld [vmem:[#allocation7 + $0xe8] sm:$0xff]
    %v116 = vld [vmem:[#allocation7 + $0xf0] sm:$0xff]
    %v117 = vld [vmem:[#allocation7 + $0xf8] sm:$0xff]
    %v118 = vld [vmem:[#allocation7 + $0x100] sm:$0xff]
    %v119 = vld [vmem:[#allocation7 + $0x108] sm:$0xff]
    %v120 = vld [vmem:[#allocation7 + $0x110] sm:$0xff]
    %v121 = vld [vmem:[#allocation7 + $0x118] sm:$0xff]
    %v122 = vld [vmem:[#allocation7 + $0x120] sm:$0xff]
    %v123 = vld [vmem:[#allocation7 + $0x128] sm:$0xff]
    %v124 = vld [vmem:[#allocation7 + $0x130] sm:$0xff]
    %v125 = vld [vmem:[#allocation7 + $0x138] sm:$0xff]
    %v126 = vld [vmem:[#allocation7 + $0x140] sm:$0xff]
    %v127 = vld [vmem:[#allocation7 + $0x148] sm:$0xff]
    %v128 = vld [vmem:[#allocation7 + $0x150] sm:$0xff]
    %v129 = vld [vmem:[#allocation7 + $0x158] sm:$0xff]
    %v130 = vld [vmem:[#allocation7 + $0x160] sm:$0xff]
    %v131 = vld [vmem:[#allocation7 + $0x168] sm:$0xff]
    %v132 = vld [vmem:[#allocation7 + $0x170] sm:$0xff]
    %v133 = vld [vmem:[#allocation7 + $0x178] sm:$0xff]
    %v134 = vld [vmem:[#allocation7 + $0x180] sm:$0xff]
    %v135 = vld [vmem:[#allocation7 + $0x188] sm:$0xff]
    %v136 = vld [vmem:[#allocation7 + $0x190] sm:$0xff]
    %v137 = vld [vmem:[#allocation7 + $0x198] sm:$0xff]
    %v138 = vld [vmem:[#allocation7 + $0x1a0] sm:$0xff]
    %v139 = vld [vmem:[#allocation7 + $0x1a8] sm:$0xff]
    %v140 = vld [vmem:[#allocation7 + $0x1b0] sm:$0xff]
    %v141 = vld [vmem:[#allocation7 + $0x1b8] sm:$0xff]
    %v142 = vld [vmem:[#allocation7 + $0x1c0] sm:$0xff]
    %v143 = vld [vmem:[#allocation7 + $0x1c8] sm:$0xff]
    %v144 = vld [vmem:[#allocation7 + $0x1d0] sm:$0xff]
    %v145 = vld [vmem:[#allocation7 + $0x1d8] sm:$0xff]
    %v146 = vld [vmem:[#allocation7 + $0x1e0] sm:$0xff]
    %v147 = vld [vmem:[#allocation7 + $0x1e8] sm:$0xff]
    %v148 = vld [vmem:[#allocation7 + $0x1f0] sm:$0xff]
    %v149 = vld [vmem:[#allocation7 + $0x1f8] sm:$0xff]
    %v150 = vld [vmem:[#allocation7 + $0x200] sm:$0xff]
    %v151 = vld [vmem:[#allocation7 + $0x208] sm:$0xff]
    %v152 = vld [vmem:[#allocation7 + $0x210] sm:$0xff]
    %v153 = vld [vmem:[#allocation7 + $0x218] sm:$0xff]
    %v154 = vld [vmem:[#allocation7 + $0x220] sm:$0xff]
    %v155 = vld [vmem:[#allocation7 + $0x228] sm:$0xff]
    %v156 = vld [vmem:[#allocation7 + $0x230] sm:$0xff]
    %v157 = vld [vmem:[#allocation7 + $0x238] sm:$0xff]
    %v158 = vld [vmem:[#allocation7 + $0x240] sm:$0xff]
    %v159 = vld [vmem:[#allocation7 + $0x248] sm:$0xff]
    %v160 = vld [vmem:[#allocation7 + $0x250] sm:$0xff]
    %v161 = vld [vmem:[#allocation7 + $0x258] sm:$0xff]
    %v162 = vld [vmem:[#allocation7 + $0x260] sm:$0xff]
    %v163 = vld [vmem:[#allocation7 + $0x268] sm:$0xff]
    %v164 = vld [vmem:[#allocation7 + $0x270] sm:$0xff]
    %v165 = vld [vmem:[#allocation7 + $0x278] sm:$0xff]
    %v169 = vunpack.c.l.b16 %v83
    %v170 = vunpack.c.h.b16 %v83
    %v171 = vunpack.c.l.b16 %v84
    %v172 = vunpack.c.h.b16 %v84
    %v173 = vunpack.c.l.b16 %v85
    %v174 = vpack.c.b16 %v169, %v169
    %v175 = vpack.c.b16 %v170, %v170
    %v176 = vpack.c.b16 %v171, %v171
    %v177 = vpack.c.b16 %v172, %v172
    %v178 = vpack.c.b16 %v173, %v173
    %v264 = vunpack.c.l.b16 %v86
    %v265 = vunpack.c.h.b16 %v86
    %v266 = vunpack.c.l.b16 %v87
    %v267 = vunpack.c.h.b16 %v87
    %v268 = vunpack.c.l.b16 %v88
    %v269 = vunpack.c.h.b16 %v88
    %v270 = vunpack.c.l.b16 %v89
    %v271 = vunpack.c.h.b16 %v89
    %v272 = vunpack.c.l.b16 %v90
    %v273 = vunpack.c.h.b16 %v90
    %v274 = vunpack.c.l.b16 %v91
    %v275 = vunpack.c.h.b16 %v91
    %v276 = vunpack.c.l.b16 %v92
    %v277 = vunpack.c.h.b16 %v92
    %v278 = vunpack.c.l.b16 %v93
    %v279 = vunpack.c.h.b16 %v93
    %v280 = vunpack.c.l.b16 %v94
    %v281 = vunpack.c.h.b16 %v94
    %v282 = vunpack.c.l.b16 %v95
    %v283 = vunpack.c.h.b16 %v95
    %v284 = vunpack.c.l.b16 %v96
    %v285 = vunpack.c.h.b16 %v96
    %v286 = vunpack.c.l.b16 %v97
    %v287 = vunpack.c.h.b16 %v97
    %v288 = vunpack.c.l.b16 %v98
    %v289 = vunpack.c.h.b16 %v98
    %v290 = vunpack.c.l.b16 %v99
    %v291 = vunpack.c.h.b16 %v99
    %v292 = vunpack.c.l.b16 %v100
    %v293 = vunpack.c.h.b16 %v100
    %v294 = vunpack.c.l.b16 %v101
    %v295 = vunpack.c.h.b16 %v101
    %v296 = vunpack.c.l.b16 %v102
    %v297 = vunpack.c.h.b16 %v102
    %v298 = vunpack.c.l.b16 %v103
    %v299 = vunpack.c.h.b16 %v103
    %v300 = vunpack.c.l.b16 %v104
    %v301 = vunpack.c.h.b16 %v104
    %v302 = vunpack.c.l.b16 %v105
    %v303 = vunpack.c.h.b16 %v105
    %v304 = vunpack.c.l.b16 %v106
    %v305 = vunpack.c.h.b16 %v106
    %v306 = vunpack.c.l.b16 %v107
    %v307 = vunpack.c.h.b16 %v107
    %v308 = vunpack.c.l.b16 %v108
    %v309 = vunpack.c.h.b16 %v108
    %v310 = vunpack.c.l.b16 %v109
    %v311 = vunpack.c.h.b16 %v109
    %v312 = vunpack.c.l.b16 %v110
    %v313 = vunpack.c.h.b16 %v110
    %v314 = vunpack.c.l.b16 %v111
    %v315 = vunpack.c.h.b16 %v111
    %v316 = vunpack.c.l.b16 %v112
    %v317 = vunpack.c.h.b16 %v112
    %v318 = vunpack.c.l.b16 %v113
    %v319 = vunpack.c.h.b16 %v113
    %v320 = vunpack.c.l.b16 %v114
    %v321 = vunpack.c.h.b16 %v114
    %v322 = vunpack.c.l.b16 %v115
    %v323 = vunpack.c.h.b16 %v115
    %v324 = vunpack.c.l.b16 %v116
    %v325 = vunpack.c.h.b16 %v116
    %v326 = vunpack.c.l.b16 %v117
    %v327 = vunpack.c.h.b16 %v117
    %v328 = vunpack.c.l.b16 %v118
    %v329 = vunpack.c.h.b16 %v118
    %v330 = vunpack.c.l.b16 %v119
    %v331 = vunpack.c.h.b16 %v119
    %v332 = vunpack.c.l.b16 %v120
    %v333 = vunpack.c.h.b16 %v120
    %v334 = vunpack.c.l.b16 %v121
    %v335 = vunpack.c.h.b16 %v121
    %v336 = vunpack.c.l.b16 %v122
    %v337 = vunpack.c.h.b16 %v122
    %v338 = vunpack.c.l.b16 %v123
    %v339 = vunpack.c.h.b16 %v123
    %v340 = vunpack.c.l.b16 %v124
    %v341 = vunpack.c.h.b16 %v124
    %v342 = vunpack.c.l.b16 %v125
    %v343 = vunpack.c.h.b16 %v125
    %v344 = vunpack.c.l.b16 %v126
    %v345 = vunpack.c.h.b16 %v126
    %v346 = vunpack.c.l.b16 %v127
    %v347 = vunpack.c.h.b16 %v127
    %v348 = vunpack.c.l.b16 %v128
    %v349 = vunpack.c.h.b16 %v128
    %v350 = vunpack.c.l.b16 %v129
    %v351 = vunpack.c.h.b16 %v129
    %v352 = vunpack.c.l.b16 %v130
    %v353 = vunpack.c.h.b16 %v130
    %v354 = vunpack.c.l.b16 %v131
    %v355 = vunpack.c.h.b16 %v131
    %v356 = vunpack.c.l.b16 %v132
    %v357 = vunpack.c.h.b16 %v132
    %v358 = vunpack.c.l.b16 %v133
    %v359 = vunpack.c.h.b16 %v133
    %v360 = vunpack.c.l.b16 %v134
    %v361 = vunpack.c.h.b16 %v134
    %v362 = vunpack.c.l.b16 %v135
    %v363 = vunpack.c.h.b16 %v135
    %v364 = vunpack.c.l.b16 %v136
    %v365 = vunpack.c.h.b16 %v136
    %v366 = vunpack.c.l.b16 %v137
    %v367 = vunpack.c.h.b16 %v137
    %v368 = vunpack.c.l.b16 %v138
    %v369 = vunpack.c.h.b16 %v138
    %v370 = vunpack.c.l.b16 %v139
    %v371 = vunpack.c.h.b16 %v139
    %v372 = vunpack.c.l.b16 %v140
    %v373 = vunpack.c.h.b16 %v140
    %v374 = vunpack.c.l.b16 %v141
    %v375 = vunpack.c.h.b16 %v141
    %v376 = vunpack.c.l.b16 %v142
    %v377 = vunpack.c.h.b16 %v142
    %v378 = vunpack.c.l.b16 %v143
    %v379 = vunpack.c.h.b16 %v143
    %v380 = vunpack.c.l.b16 %v144
    %v381 = vunpack.c.h.b16 %v144
    %v382 = vunpack.c.l.b16 %v145
    %v383 = vunpack.c.h.b16 %v145
    %v384 = vunpack.c.l.b16 %v146
    %v385 = vunpack.c.h.b16 %v146
    %v386 = vunpack.c.l.b16 %v147
    %v387 = vunpack.c.h.b16 %v147
    %v388 = vunpack.c.l.b16 %v148
    %v389 = vunpack.c.h.b16 %v148
    %v390 = vunpack.c.l.b16 %v149
    %v391 = vunpack.c.h.b16 %v149
    %v392 = vunpack.c.l.b16 %v150
    %v393 = vunpack.c.h.b16 %v150
    %v394 = vunpack.c.l.b16 %v151
    %v395 = vunpack.c.h.b16 %v151
    %v396 = vunpack.c.l.b16 %v152
    %v397 = vunpack.c.h.b16 %v152
    %v398 = vunpack.c.l.b16 %v153
    %v399 = vunpack.c.h.b16 %v153
    %v400 = vunpack.c.l.b16 %v154
    %v401 = vunpack.c.h.b16 %v154
    %v402 = vunpack.c.l.b16 %v155
    %v403 = vunpack.c.h.b16 %v155
    %v404 = vunpack.c.l.b16 %v156
    %v405 = vunpack.c.h.b16 %v156
    %v406 = vunpack.c.l.b16 %v157
    %v407 = vunpack.c.h.b16 %v157
    %v408 = vunpack.c.l.b16 %v158
    %v409 = vunpack.c.h.b16 %v158
    %v410 = vunpack.c.l.b16 %v159
    %v411 = vunpack.c.h.b16 %v159
    %v412 = vunpack.c.l.b16 %v160
    %v413 = vunpack.c.h.b16 %v160
    %v414 = vunpack.c.l.b16 %v161
    %v415 = vunpack.c.h.b16 %v161
    %v416 = vunpack.c.l.b16 %v162
    %v417 = vunpack.c.h.b16 %v162
    %v418 = vunpack.c.l.b16 %v163
    %v419 = vunpack.c.h.b16 %v163
    %v420 = vunpack.c.l.b16 %v164
    %v421 = vunpack.c.h.b16 %v164
    %v422 = vunpack.c.l.b16 %v165
    %v423 = vunpack.c.h.b16 %v165
    %v424 = vpack.c.b16 %v266, %v264
    %v425 = vpack.c.b16 %v267, %v265
    %v426 = vpack.c.b16 %v270, %v268
    %v427 = vpack.c.b16 %v271, %v269
    %v428 = vpack.c.b16 %v274, %v272
    %v429 = vpack.c.b16 %v275, %v273
    %v430 = vpack.c.b16 %v278, %v276
    %v431 = vpack.c.b16 %v279, %v277
    %v432 = vpack.c.b16 %v282, %v280
    %v433 = vpack.c.b16 %v283, %v281
    %v434 = vpack.c.b16 %v286, %v284
    %v435 = vpack.c.b16 %v287, %v285
    %v436 = vpack.c.b16 %v290, %v288
    %v437 = vpack.c.b16 %v291, %v289
    %v438 = vpack.c.b16 %v294, %v292
    %v439 = vpack.c.b16 %v295, %v293
    %v440 = vpack.c.b16 %v298, %v296
    %v441 = vpack.c.b16 %v299, %v297
    %v442 = vpack.c.b16 %v302, %v300
    %v443 = vpack.c.b16 %v303, %v301
    %v444 = vpack.c.b16 %v306, %v304
    %v445 = vpack.c.b16 %v307, %v305
    %v446 = vpack.c.b16 %v310, %v308
    %v447 = vpack.c.b16 %v311, %v309
    %v448 = vpack.c.b16 %v314, %v312
    %v449 = vpack.c.b16 %v315, %v313
    %v450 = vpack.c.b16 %v318, %v316
    %v451 = vpack.c.b16 %v319, %v317
    %v452 = vpack.c.b16 %v322, %v320
    %v453 = vpack.c.b16 %v323, %v321
    %v454 = vpack.c.b16 %v326, %v324
    %v455 = vpack.c.b16 %v327, %v325
    %v456 = vpack.c.b16 %v330, %v328
    %v457 = vpack.c.b16 %v331, %v329
    %v458 = vpack.c.b16 %v334, %v332
    %v459 = vpack.c.b16 %v335, %v333
    %v460 = vpack.c.b16 %v338, %v336
    %v461 = vpack.c.b16 %v339, %v337
    %v462 = vpack.c.b16 %v342, %v340
    %v463 = vpack.c.b16 %v343, %v341
    %v464 = vpack.c.b16 %v346, %v344
    %v465 = vpack.c.b16 %v347, %v345
    %v466 = vpack.c.b16 %v350, %v348
    %v467 = vpack.c.b16 %v351, %v349
    %v468 = vpack.c.b16 %v354, %v352
    %v469 = vpack.c.b16 %v355, %v353
    %v470 = vpack.c.b16 %v358, %v356
    %v471 = vpack.c.b16 %v359, %v357
    %v472 = vpack.c.b16 %v362, %v360
    %v473 = vpack.c.b16 %v363, %v361
    %v474 = vpack.c.b16 %v366, %v364
    %v475 = vpack.c.b16 %v367, %v365
    %v476 = vpack.c.b16 %v370, %v368
    %v477 = vpack.c.b16 %v371, %v369
    %v478 = vpack.c.b16 %v374, %v372
    %v479 = vpack.c.b16 %v375, %v373
    %v480 = vpack.c.b16 %v378, %v376
    %v481 = vpack.c.b16 %v379, %v377
    %v482 = vpack.c.b16 %v382, %v380
    %v483 = vpack.c.b16 %v383, %v381
    %v484 = vpack.c.b16 %v386, %v384
    %v485 = vpack.c.b16 %v387, %v385
    %v486 = vpack.c.b16 %v390, %v388
    %v487 = vpack.c.b16 %v391, %v389
    %v488 = vpack.c.b16 %v394, %v392
    %v489 = vpack.c.b16 %v395, %v393
    %v490 = vpack.c.b16 %v398, %v396
    %v491 = vpack.c.b16 %v399, %v397
    %v492 = vpack.c.b16 %v402, %v400
    %v493 = vpack.c.b16 %v403, %v401
    %v494 = vpack.c.b16 %v406, %v404
    %v495 = vpack.c.b16 %v407, %v405
    %v496 = vpack.c.b16 %v410, %v408
    %v497 = vpack.c.b16 %v411, %v409
    %v498 = vpack.c.b16 %v414, %v412
    %v499 = vpack.c.b16 %v415, %v413
    %v500 = vpack.c.b16 %v418, %v416
    %v501 = vpack.c.b16 %v419, %v417
    %v502 = vpack.c.b16 %v422, %v420
    %v503 = vpack.c.b16 %v423, %v421
    %584 = vmatprep.subr.bf16.mxu0 %v425
    %585 = vmatpush1.bf16.msra.mxu0 %v424
    %586 = vmatprep.subr.bf16.mxu0 %v427
    %587 = vmatpush1.bf16.msra.mxu0 %v426
    %588 = vmatprep.subr.bf16.mxu0 %v429
    %589 = vmatpush1.bf16.msra.mxu0 %v428
    %590 = vmatprep.subr.bf16.mxu0 %v431
    %591 = vmatpush1.bf16.msra.mxu0 %v430
    %592 = vmatprep.subr.bf16.mxu0 %v433
    %593 = vmatpush1.bf16.msra.mxu0 %v432
    %594 = vmatprep.subr.bf16.mxu0 %v435
    %595 = vmatpush1.bf16.msra.mxu0 %v434
    %596 = vmatprep.subr.bf16.mxu0 %v437
    %597 = vmatpush1.bf16.msra.mxu0 %v436
    %598 = vmatprep.subr.bf16.mxu0 %v439
    %599 = vmatpush1.bf16.msra.mxu0 %v438
    %600 = vmatprep.subr.bf16.mxu0 %v441
    %601 = vmatpush1.bf16.msra.mxu0 %v440
    %602 = vmatprep.subr.bf16.mxu0 %v443
    %603 = vmatpush1.bf16.msra.mxu0 %v442
    %604 = vmatprep.subr.bf16.mxu0 %v445
    %605 = vmatpush1.bf16.msra.mxu0 %v444
    %606 = vmatprep.subr.bf16.mxu0 %v447
    %607 = vmatpush1.bf16.msra.mxu0 %v446
    %608 = vmatprep.subr.bf16.mxu0 %v449
    %609 = vmatpush1.bf16.msra.mxu0 %v448
    %610 = vmatprep.subr.bf16.mxu0 %v451
    %611 = vmatpush1.bf16.msra.mxu0 %v450
    %612 = vmatprep.subr.bf16.mxu0 %v453
    %613 = vmatpush1.bf16.msra.mxu0 %v452
    %614 = vmatprep.subr.bf16.mxu0 %v455
    %615 = vmatpush1.bf16.msra.mxu0 %v454
    %616 = vmatprep.mubr.bf16.mxu0 %v175
    %617 = vmatmul.mubr.bf16.gmra.mrb[0].mxu0 %v174
    %v618 = vpop.f32.mrb[0].mxu0
    %v619 = vadd.f32 0.0, %v618
    %v620 = vpop.f32.mrb[0].mxu0
    %v621 = vadd.f32 0.0, %v620
    %v622 = vpop.f32.mrb[0].mxu0
    %v623 = vpop.f32.mrb[0].mxu0
    %624 = vdwg.mxu0
    %625 = vmatprep.subr.bf16.mxu0 %v457
    %626 = vmatpush1.bf16.msra.mxu0 %v456
    %627 = vmatprep.subr.bf16.mxu0 %v459
    %628 = vmatpush1.bf16.msra.mxu0 %v458
    %629 = vmatprep.subr.bf16.mxu0 %v461
    %630 = vmatpush1.bf16.msra.mxu0 %v460
    %631 = vmatprep.subr.bf16.mxu0 %v463
    %632 = vmatpush1.bf16.msra.mxu0 %v462
    %633 = vmatprep.subr.bf16.mxu0 %v465
    %634 = vmatpush1.bf16.msra.mxu0 %v464
    %635 = vmatprep.subr.bf16.mxu0 %v467
    %636 = vmatpush1.bf16.msra.mxu0 %v466
    %637 = vmatprep.subr.bf16.mxu0 %v469
    %638 = vmatpush1.bf16.msra.mxu0 %v468
    %639 = vmatprep.subr.bf16.mxu0 %v471
    %640 = vmatpush1.bf16.msra.mxu0 %v470
    %641 = vmatprep.subr.bf16.mxu0 %v473
    %642 = vmatpush1.bf16.msra.mxu0 %v472
    %643 = vmatprep.subr.bf16.mxu0 %v475
    %644 = vmatpush1.bf16.msra.mxu0 %v474
    %645 = vmatprep.subr.bf16.mxu0 %v477
    %646 = vmatpush1.bf16.msra.mxu0 %v476
    %647 = vmatprep.subr.bf16.mxu0 %v479
    %648 = vmatpush1.bf16.msra.mxu0 %v478
    %649 = vmatprep.subr.bf16.mxu0 %v481
    %650 = vmatpush1.bf16.msra.mxu0 %v480
    %651 = vmatprep.subr.bf16.mxu0 %v483
    %652 = vmatpush1.bf16.msra.mxu0 %v482
    %653 = vmatprep.subr.bf16.mxu0 %v485
    %654 = vmatpush1.bf16.msra.mxu0 %v484
    %655 = vmatprep.subr.bf16.mxu0 %v487
    %656 = vmatpush1.bf16.msra.mxu0 %v486
    %657 = vmatprep.mubr.bf16.mxu0 %v177
    %658 = vmatmul.mubr.bf16.gmra.mrb[0].mxu0 %v176
    %v659 = vpop.f32.mrb[0].mxu0
    %v660 = vadd.f32 %v619, %v659
    %v661 = vpop.f32.mrb[0].mxu0
    %v662 = vadd.f32 %v621, %v661
    %v663 = vpop.f32.mrb[0].mxu0
    %v664 = vpop.f32.mrb[0].mxu0
    %665 = vdwg.mxu0
    %666 = vmatprep.subr.bf16.mxu0 %v489
    %667 = vmatpush1.bf16.msra.mxu0 %v488
    %668 = vmatprep.subr.bf16.mxu0 %v491
    %669 = vmatpush1.bf16.msra.mxu0 %v490
    %670 = vmatprep.subr.bf16.mxu0 %v493
    %671 = vmatpush1.bf16.msra.mxu0 %v492
    %672 = vmatprep.subr.bf16.mxu0 %v495
    %673 = vmatpush1.bf16.msra.mxu0 %v494
    %674 = vmatprep.subr.bf16.mxu0 %v497
    %675 = vmatpush1.bf16.msra.mxu0 %v496
    %676 = vmatprep.subr.bf16.mxu0 %v499
    %677 = vmatpush1.bf16.msra.mxu0 %v498
    %678 = vmatprep.subr.bf16.mxu0 %v501
    %679 = vmatpush1.bf16.msra.mxu0 %v500
    %680 = vmatprep.subr.bf16.mxu0 %v503
    %681 = vmatpush1.bf16.msra.mxu0 %v502
    %682 = vmatprep.subr.bf16.mxu0 0
    %683 = vmatpush1.bf16.msra.mxu0 0
    %684 = vmatprep.subr.bf16.mxu0 0
    %685 = vmatpush1.bf16.msra.mxu0 0
    %686 = vmatprep.subr.bf16.mxu0 0
    %687 = vmatpush1.bf16.msra.mxu0 0
    %688 = vmatprep.subr.bf16.mxu0 0
    %689 = vmatpush1.bf16.msra.mxu0 0
    %690 = vmatprep.subr.bf16.mxu0 0
    %691 = vmatpush1.bf16.msra.mxu0 0
    %692 = vmatprep.subr.bf16.mxu0 0
    %693 = vmatpush1.bf16.msra.mxu0 0
    %694 = vmatprep.subr.bf16.mxu0 0
    %695 = vmatpush1.bf16.msra.mxu0 0
    %696 = vmatprep.subr.bf16.mxu0 0
    %697 = vmatpush1.bf16.msra.mxu0 0
    %698 = vmatprep.mubr.bf16.mxu0 0
    %699 = vmatmul.mubr.bf16.gmra.mrb[0].mxu0 %v178
    %v700 = vpop.f32.mrb[0].mxu0
    %v701 = vadd.f32 %v660, %v700
    %v702 = vpop.f32.mrb[0].mxu0
    %v703 = vadd.f32 %v662, %v702
    %v704 = vpop.f32.mrb[0].mxu0
    %v705 = vpop.f32.mrb[0].mxu0
    %706 = vdwg.mxu0
    %v707 = vmax.f32 %v701, %v703
    %708 = vmax.xlane.f32.xlu0 %v707
    %v709 = vpop.xlane.xlu0 %708
    %v710 = vadd.f32 %v709, 1e-08
    %v711 = vrcp.pop %v710
    %v712 = vmul.f32 %v701, %v711
    %v713 = vmul.f32 %v703, %v711
    %s714 = sld [smem:[#allocation2]]
    %s715 = sld [smem:[#allocation3]]
    %v716 = vadd.f32 %v712, %v713
    %717 = vadd.xlane.f32.xlu0 %v716
    %v718 = vpop.xlane.xlu0 %717
    %v719 = vrcp.pop 256.0
    %v720 = vmul.f32 %v718, %v719
    %v721 = vstv %s715
    %v722 = vmul.f32 %v721, %v720
    %v723 = vsub.f32 %v712, %v722
    %v724 = vsub.f32 %v713, %v722
    %v725 = vstv %s714
    %v726 = vmul.f32 %v725, %v723
    %v727 = vmul.f32 %v725, %v724
    %v728 = vxor.u32 %v726, 2147483648
    %v729 = vxor.u32 %v727, 2147483648
    %v730 = vmul.f32 %v728, 1.442695
    %v731 = vpow.pop %v730
    %v732 = vmul.f32 %v729, 1.442695
    %v733 = vpow.pop %v732
    %v734 = vadd.f32 %v731, 1.0
    %v735 = vadd.f32 %v733, 1.0
    %v736 = vrcp.pop %v734
    %v737 = vmul.f32 1.0, %v736
    %v738 = vrcp.pop %v735
    %v739 = vmul.f32 1.0, %v738
    %v740 = vpack.c.bf16 %v737, %v737
    %v741 = vpack.c.bf16 %v739, %v739
    %v742 = vld [vmem:[#allocation9] sm:$0xff]
    %v743 = vld [vmem:[#allocation9 + $0x8] sm:$0xff]
    %v744 = vld [vmem:[#allocation9 + $0x10] sm:$0xff]
    %v745 = vld [vmem:[#allocation9 + $0x18] sm:$0xff]
    %v746 = vld [vmem:[#allocation9 + $0x20] sm:$0xff]
    %v747 = vld [vmem:[#allocation9 + $0x28] sm:$0xff]
    %v748 = vld [vmem:[#allocation9 + $0x30] sm:$0xff]
    %v749 = vld [vmem:[#allocation9 + $0x38] sm:$0xff]
    %v750 = vld [vmem:[#allocation9 + $0x40] sm:$0xff]
    %v751 = vld [vmem:[#allocation9 + $0x48] sm:$0xff]
    %v752 = vld [vmem:[#allocation9 + $0x50] sm:$0xff]
    %v753 = vld [vmem:[#allocation9 + $0x58] sm:$0xff]
    %v754 = vld [vmem:[#allocation9 + $0x60] sm:$0xff]
    %v755 = vld [vmem:[#allocation9 + $0x68] sm:$0xff]
    %v756 = vld [vmem:[#allocation9 + $0x70] sm:$0xff]
    %v757 = vld [vmem:[#allocation9 + $0x78] sm:$0xff]
    %v758 = vld [vmem:[#allocation9 + $0x80] sm:$0xff]
    %v759 = vld [vmem:[#allocation9 + $0x88] sm:$0xff]
    %v760 = vld [vmem:[#allocation9 + $0x90] sm:$0xff]
    %v761 = vld [vmem:[#allocation9 + $0x98] sm:$0xff]
    %v762 = vld [vmem:[#allocation9 + $0xa0] sm:$0xff]
    %v763 = vld [vmem:[#allocation9 + $0xa8] sm:$0xff]
    %v764 = vld [vmem:[#allocation9 + $0xb0] sm:$0xff]
    %v765 = vld [vmem:[#allocation9 + $0xb8] sm:$0xff]
    %v766 = vld [vmem:[#allocation9 + $0xc0] sm:$0xff]
    %v767 = vld [vmem:[#allocation9 + $0xc8] sm:$0xff]
    %v768 = vld [vmem:[#allocation9 + $0xd0] sm:$0xff]
    %v769 = vld [vmem:[#allocation9 + $0xd8] sm:$0xff]
    %v770 = vld [vmem:[#allocation9 + $0xe0] sm:$0xff]
    %v771 = vld [vmem:[#allocation9 + $0xe8] sm:$0xff]
    %v772 = vld [vmem:[#allocation9 + $0xf0] sm:$0xff]
    %v773 = vld [vmem:[#allocation9 + $0xf8] sm:$0xff]
    %v774 = vld [vmem:[#allocation9 + $0x100] sm:$0xff]
    %v775 = vld [vmem:[#allocation9 + $0x108] sm:$0xff]
    %v776 = vld [vmem:[#allocation9 + $0x110] sm:$0xff]
    %v777 = vld [vmem:[#allocation9 + $0x118] sm:$0xff]
    %v778 = vld [vmem:[#allocation9 + $0x120] sm:$0xff]
    %v779 = vld [vmem:[#allocation9 + $0x128] sm:$0xff]
    %v780 = vld [vmem:[#allocation9 + $0x130] sm:$0xff]
    %v781 = vld [vmem:[#allocation9 + $0x138] sm:$0xff]
    %v782 = vld [vmem:[#allocation9 + $0x140] sm:$0xff]
    %v783 = vld [vmem:[#allocation9 + $0x148] sm:$0xff]
    %v784 = vld [vmem:[#allocation9 + $0x150] sm:$0xff]
    %v785 = vld [vmem:[#allocation9 + $0x158] sm:$0xff]
    %v786 = vld [vmem:[#allocation9 + $0x160] sm:$0xff]
    %v787 = vld [vmem:[#allocation9 + $0x168] sm:$0xff]
    %v788 = vld [vmem:[#allocation9 + $0x170] sm:$0xff]
    %v789 = vld [vmem:[#allocation9 + $0x178] sm:$0xff]
    %v790 = vld [vmem:[#allocation9 + $0x180] sm:$0xff]
    %v791 = vld [vmem:[#allocation9 + $0x188] sm:$0xff]
    %v792 = vld [vmem:[#allocation9 + $0x190] sm:$0xff]
    %v793 = vld [vmem:[#allocation9 + $0x198] sm:$0xff]
    %v794 = vld [vmem:[#allocation9 + $0x1a0] sm:$0xff]
    %v795 = vld [vmem:[#allocation9 + $0x1a8] sm:$0xff]
    %v796 = vld [vmem:[#allocation9 + $0x1b0] sm:$0xff]
    %v797 = vld [vmem:[#allocation9 + $0x1b8] sm:$0xff]
    %v798 = vld [vmem:[#allocation9 + $0x1c0] sm:$0xff]
    %v799 = vld [vmem:[#allocation9 + $0x1c8] sm:$0xff]
    %v800 = vld [vmem:[#allocation9 + $0x1d0] sm:$0xff]
    %v801 = vld [vmem:[#allocation9 + $0x1d8] sm:$0xff]
    %v802 = vld [vmem:[#allocation9 + $0x1e0] sm:$0xff]
    %v803 = vld [vmem:[#allocation9 + $0x1e8] sm:$0xff]
    %v804 = vld [vmem:[#allocation9 + $0x1f0] sm:$0xff]
    %v805 = vld [vmem:[#allocation9 + $0x1f8] sm:$0xff]
    %v870 = vunpack.c.l.b16 %v742
    %v871 = vunpack.c.h.b16 %v742
    %v872 = vunpack.c.l.b16 %v743
    %v873 = vunpack.c.h.b16 %v743
    %v874 = vunpack.c.l.b16 %v744
    %v875 = vunpack.c.h.b16 %v744
    %v876 = vunpack.c.l.b16 %v745
    %v877 = vunpack.c.h.b16 %v745
    %v878 = vunpack.c.l.b16 %v746
    %v879 = vunpack.c.h.b16 %v746
    %v880 = vunpack.c.l.b16 %v747
    %v881 = vunpack.c.h.b16 %v747
    %v882 = vunpack.c.l.b16 %v748
    %v883 = vunpack.c.h.b16 %v748
    %v884 = vunpack.c.l.b16 %v749
    %v885 = vunpack.c.h.b16 %v749
    %v886 = vunpack.c.l.b16 %v750
    %v887 = vunpack.c.h.b16 %v750
    %v888 = vunpack.c.l.b16 %v751
    %v889 = vunpack.c.h.b16 %v751
    %v890 = vunpack.c.l.b16 %v752
    %v891 = vunpack.c.h.b16 %v752
    %v892 = vunpack.c.l.b16 %v753
    %v893 = vunpack.c.h.b16 %v753
    %v894 = vunpack.c.l.b16 %v754
    %v895 = vunpack.c.h.b16 %v754
    %v896 = vunpack.c.l.b16 %v755
    %v897 = vunpack.c.h.b16 %v755
    %v898 = vunpack.c.l.b16 %v756
    %v899 = vunpack.c.h.b16 %v756
    %v900 = vunpack.c.l.b16 %v757
    %v901 = vunpack.c.h.b16 %v757
    %v902 = vunpack.c.l.b16 %v758
    %v903 = vunpack.c.h.b16 %v758
    %v904 = vunpack.c.l.b16 %v759
    %v905 = vunpack.c.h.b16 %v759
    %v906 = vunpack.c.l.b16 %v760
    %v907 = vunpack.c.h.b16 %v760
    %v908 = vunpack.c.l.b16 %v761
    %v909 = vunpack.c.h.b16 %v761
    %v910 = vunpack.c.l.b16 %v762
    %v911 = vunpack.c.h.b16 %v762
    %v912 = vunpack.c.l.b16 %v763
    %v913 = vunpack.c.h.b16 %v763
    %v914 = vunpack.c.l.b16 %v764
    %v915 = vunpack.c.h.b16 %v764
    %v916 = vunpack.c.l.b16 %v765
    %v917 = vunpack.c.h.b16 %v765
    %v918 = vunpack.c.l.b16 %v766
    %v919 = vunpack.c.h.b16 %v766
    %v920 = vunpack.c.l.b16 %v767
    %v921 = vunpack.c.h.b16 %v767
    %v922 = vunpack.c.l.b16 %v768
    %v923 = vunpack.c.h.b16 %v768
    %v924 = vunpack.c.l.b16 %v769
    %v925 = vunpack.c.h.b16 %v769
    %v926 = vunpack.c.l.b16 %v770
    %v927 = vunpack.c.h.b16 %v770
    %v928 = vunpack.c.l.b16 %v771
    %v929 = vunpack.c.h.b16 %v771
    %v930 = vunpack.c.l.b16 %v772
    %v931 = vunpack.c.h.b16 %v772
    %v932 = vunpack.c.l.b16 %v773
    %v933 = vunpack.c.h.b16 %v773
    %v934 = vunpack.c.l.b16 %v774
    %v935 = vunpack.c.h.b16 %v774
    %v936 = vunpack.c.l.b16 %v775
    %v937 = vunpack.c.h.b16 %v775
    %v938 = vunpack.c.l.b16 %v776
    %v939 = vunpack.c.h.b16 %v776
    %v940 = vunpack.c.l.b16 %v777
    %v941 = vunpack.c.h.b16 %v777
    %v942 = vunpack.c.l.b16 %v778
    %v943 = vunpack.c.h.b16 %v778
    %v944 = vunpack.c.l.b16 %v779
    %v945 = vunpack.c.h.b16 %v779
    %v946 = vunpack.c.l.b16 %v780
    %v947 = vunpack.c.h.b16 %v780
    %v948 = vunpack.c.l.b16 %v781
    %v949 = vunpack.c.h.b16 %v781
    %v950 = vunpack.c.l.b16 %v782
    %v951 = vunpack.c.h.b16 %v782
    %v952 = vunpack.c.l.b16 %v783
    %v953 = vunpack.c.h.b16 %v783
    %v954 = vunpack.c.l.b16 %v784
    %v955 = vunpack.c.h.b16 %v784
    %v956 = vunpack.c.l.b16 %v785
    %v957 = vunpack.c.h.b16 %v785
    %v958 = vunpack.c.l.b16 %v786
    %v959 = vunpack.c.h.b16 %v786
    %v960 = vunpack.c.l.b16 %v787
    %v961 = vunpack.c.h.b16 %v787
    %v962 = vunpack.c.l.b16 %v788
    %v963 = vunpack.c.h.b16 %v788
    %v964 = vunpack.c.l.b16 %v789
    %v965 = vunpack.c.h.b16 %v789
    %v966 = vunpack.c.l.b16 %v790
    %v967 = vunpack.c.h.b16 %v790
    %v968 = vunpack.c.l.b16 %v791
    %v969 = vunpack.c.h.b16 %v791
    %v970 = vunpack.c.l.b16 %v792
    %v971 = vunpack.c.h.b16 %v792
    %v972 = vunpack.c.l.b16 %v793
    %v973 = vunpack.c.h.b16 %v793
    %v974 = vunpack.c.l.b16 %v794
    %v975 = vunpack.c.h.b16 %v794
    %v976 = vunpack.c.l.b16 %v795
    %v977 = vunpack.c.h.b16 %v795
    %v978 = vunpack.c.l.b16 %v796
    %v979 = vunpack.c.h.b16 %v796
    %v980 = vunpack.c.l.b16 %v797
    %v981 = vunpack.c.h.b16 %v797
    %v982 = vunpack.c.l.b16 %v798
    %v983 = vunpack.c.h.b16 %v798
    %v984 = vunpack.c.l.b16 %v799
    %v985 = vunpack.c.h.b16 %v799
    %v986 = vunpack.c.l.b16 %v800
    %v987 = vunpack.c.h.b16 %v800
    %v988 = vunpack.c.l.b16 %v801
    %v989 = vunpack.c.h.b16 %v801
    %v990 = vunpack.c.l.b16 %v802
    %v991 = vunpack.c.h.b16 %v802
    %v992 = vunpack.c.l.b16 %v803
    %v993 = vunpack.c.h.b16 %v803
    %v994 = vunpack.c.l.b16 %v804
    %v995 = vunpack.c.h.b16 %v804
    %v996 = vunpack.c.l.b16 %v805
    %v997 = vunpack.c.h.b16 %v805
    %v998 = vpack.c.b16 %v874, %v870
    %v999 = vpack.c.b16 %v875, %v871
    %v1000 = vpack.c.b16 %v876, %v872
    %v1001 = vpack.c.b16 %v877, %v873
    %v1002 = vpack.c.b16 %v882, %v878
    %v1003 = vpack.c.b16 %v883, %v879
    %v1004 = vpack.c.b16 %v884, %v880
    %v1005 = vpack.c.b16 %v885, %v881
    %v1006 = vpack.c.b16 %v890, %v886
    %v1007 = vpack.c.b16 %v891, %v887
    %v1008 = vpack.c.b16 %v892, %v888
    %v1009 = vpack.c.b16 %v893, %v889
    %v1010 = vpack.c.b16 %v898, %v894
    %v1011 = vpack.c.b16 %v899, %v895
    %v1012 = vpack.c.b16 %v900, %v896
    %v1013 = vpack.c.b16 %v901, %v897
    %v1014 = vpack.c.b16 %v906, %v902
    %v1015 = vpack.c.b16 %v907, %v903
    %v1016 = vpack.c.b16 %v908, %v904
    %v1017 = vpack.c.b16 %v909, %v905
    %v1018 = vpack.c.b16 %v914, %v910
    %v1019 = vpack.c.b16 %v915, %v911
    %v1020 = vpack.c.b16 %v916, %v912
    %v1021 = vpack.c.b16 %v917, %v913
    %v1022 = vpack.c.b16 %v922, %v918
    %v1023 = vpack.c.b16 %v923, %v919
    %v1024 = vpack.c.b16 %v924, %v920
    %v1025 = vpack.c.b16 %v925, %v921
    %v1026 = vpack.c.b16 %v930, %v926
    %v1027 = vpack.c.b16 %v931, %v927
    %v1028 = vpack.c.b16 %v932, %v928
    %v1029 = vpack.c.b16 %v933, %v929
    %v1030 = vpack.c.b16 %v938, %v934
    %v1031 = vpack.c.b16 %v939, %v935
    %v1032 = vpack.c.b16 %v940, %v936
    %v1033 = vpack.c.b16 %v941, %v937
    %v1034 = vpack.c.b16 %v946, %v942
    %v1035 = vpack.c.b16 %v947, %v943
    %v1036 = vpack.c.b16 %v948, %v944
    %v1037 = vpack.c.b16 %v949, %v945
    %v1038 = vpack.c.b16 %v954, %v950
    %v1039 = vpack.c.b16 %v955, %v951
    %v1040 = vpack.c.b16 %v956, %v952
    %v1041 = vpack.c.b16 %v957, %v953
    %v1042 = vpack.c.b16 %v962, %v958
    %v1043 = vpack.c.b16 %v963, %v959
    %v1044 = vpack.c.b16 %v964, %v960
    %v1045 = vpack.c.b16 %v965, %v961
    %v1046 = vpack.c.b16 %v970, %v966
    %v1047 = vpack.c.b16 %v971, %v967
    %v1048 = vpack.c.b16 %v972, %v968
    %v1049 = vpack.c.b16 %v973, %v969
    %v1050 = vpack.c.b16 %v978, %v974
    %v1051 = vpack.c.b16 %v979, %v975
    %v1052 = vpack.c.b16 %v980, %v976
    %v1053 = vpack.c.b16 %v981, %v977
    %v1054 = vpack.c.b16 %v986, %v982
    %v1055 = vpack.c.b16 %v987, %v983
    %v1056 = vpack.c.b16 %v988, %v984
    %v1057 = vpack.c.b16 %v989, %v985
    %v1058 = vpack.c.b16 %v994, %v990
    %v1059 = vpack.c.b16 %v995, %v991
    %v1060 = vpack.c.b16 %v996, %v992
    %v1061 = vpack.c.b16 %v997, %v993
    %1126 = vmatprep.subr.bf16.mxu0 %v999
    %1127 = vmatpush1.bf16.msra.mxu0 %v998
    %1128 = vmatprep.subr.bf16.mxu0 %v1003
    %1129 = vmatpush1.bf16.msra.mxu0 %v1002
    %1130 = vmatprep.subr.bf16.mxu0 %v1007
    %1131 = vmatpush1.bf16.msra.mxu0 %v1006
    %1132 = vmatprep.subr.bf16.mxu0 %v1011
    %1133 = vmatpush1.bf16.msra.mxu0 %v1010
    %1134 = vmatprep.subr.bf16.mxu0 %v1015
    %1135 = vmatpush1.bf16.msra.mxu0 %v1014
    %1136 = vmatprep.subr.bf16.mxu0 %v1019
    %1137 = vmatpush1.bf16.msra.mxu0 %v1018
    %1138 = vmatprep.subr.bf16.mxu0 %v1023
    %1139 = vmatpush1.bf16.msra.mxu0 %v1022
    %1140 = vmatprep.subr.bf16.mxu0 %v1027
    %1141 = vmatpush1.bf16.msra.mxu0 %v1026
    %1142 = vmatprep.subr.bf16.mxu0 %v1031
    %1143 = vmatpush1.bf16.msra.mxu0 %v1030
    %1144 = vmatprep.subr.bf16.mxu0 %v1035
    %1145 = vmatpush1.bf16.msra.mxu0 %v1034
    %1146 = vmatprep.subr.bf16.mxu0 %v1039
    %1147 = vmatpush1.bf16.msra.mxu0 %v1038
    %1148 = vmatprep.subr.bf16.mxu0 %v1043
    %1149 = vmatpush1.bf16.msra.mxu0 %v1042
    %1150 = vmatprep.subr.bf16.mxu0 %v1047
    %1151 = vmatpush1.bf16.msra.mxu0 %v1046
    %1152 = vmatprep.subr.bf16.mxu0 %v1051
    %1153 = vmatpush1.bf16.msra.mxu0 %v1050
    %1154 = vmatprep.subr.bf16.mxu0 %v1055
    %1155 = vmatpush1.bf16.msra.mxu0 %v1054
    %1156 = vmatprep.subr.bf16.mxu0 %v1059
    %1157 = vmatpush1.bf16.msra.mxu0 %v1058
    %1158 = vmatprep.mubr.bf16.mxu0 %v741
    %1159 = vmatmul.mubr.bf16.gmra.mrb[0].mxu0 %v740
    %v1160 = vpop.f32.mrb[0].mxu0
    %v1161 = vadd.f32 0.0, %v1160
    %v1162 = vpop.f32.mrb[0].mxu0
    %v1163 = vadd.f32 0.0, %v1162
    %v1164 = vpop.f32.mrb[0].mxu0
    %v1165 = vpop.f32.mrb[0].mxu0
    %1166 = vdwg.mxu0
    %1167 = vmatprep.subr.bf16.mxu0 %v1001
    %1168 = vmatpush1.bf16.msra.mxu0 %v1000
    %1169 = vmatprep.subr.bf16.mxu0 %v1005
    %1170 = vmatpush1.bf16.msra.mxu0 %v1004
    %1171 = vmatprep.subr.bf16.mxu0 %v1009
    %1172 = vmatpush1.bf16.msra.mxu0 %v1008
    %1173 = vmatprep.subr.bf16.mxu0 %v1013
    %1174 = vmatpush1.bf16.msra.mxu0 %v1012
    %1175 = vmatprep.subr.bf16.mxu0 %v1017
    %1176 = vmatpush1.bf16.msra.mxu0 %v1016
    %1177 = vmatprep.subr.bf16.mxu0 %v1021
    %1178 = vmatpush1.bf16.msra.mxu0 %v1020
    %1179 = vmatprep.subr.bf16.mxu0 %v1025
    %1180 = vmatpush1.bf16.msra.mxu0 %v1024
    %1181 = vmatprep.subr.bf16.mxu0 %v1029
    %1182 = vmatpush1.bf16.msra.mxu0 %v1028
    %1183 = vmatprep.subr.bf16.mxu0 %v1033
    %1184 = vmatpush1.bf16.msra.mxu0 %v1032
    %1185 = vmatprep.subr.bf16.mxu0 %v1037
    %1186 = vmatpush1.bf16.msra.mxu0 %v1036
    %1187 = vmatprep.subr.bf16.mxu0 %v1041
    %1188 = vmatpush1.bf16.msra.mxu0 %v1040
    %1189 = vmatprep.subr.bf16.mxu0 %v1045
    %1190 = vmatpush1.bf16.msra.mxu0 %v1044
    %1191 = vmatprep.subr.bf16.mxu0 %v1049
    %1192 = vmatpush1.bf16.msra.mxu0 %v1048
    %1193 = vmatprep.subr.bf16.mxu0 %v1053
    %1194 = vmatpush1.bf16.msra.mxu0 %v1052
    %1195 = vmatprep.subr.bf16.mxu0 %v1057
    %1196 = vmatpush1.bf16.msra.mxu0 %v1056
    %1197 = vmatprep.subr.bf16.mxu0 %v1061
    %1198 = vmatpush1.bf16.msra.mxu0 %v1060
    %1199 = vmatprep.mubr.bf16.mxu0 %v741
    %1200 = vmatmul.mubr.bf16.gmra.mrb[0].mxu0 %v740
    %v1201 = vpop.f32.mrb[0].mxu0
    %v1202 = vadd.f32 0.0, %v1201
    %v1203 = vpop.f32.mrb[0].mxu0
    %v1204 = vadd.f32 0.0, %v1203
    %v1205 = vpop.f32.mrb[0].mxu0
    %v1206 = vpop.f32.mrb[0].mxu0
    %1207 = vdwg.mxu0
    %v1208 = vmul.f32 %v1161, %v1161
    %v1209 = vmul.f32 %v1163, %v1163
    %v1210 = vmul.f32 %v1202, %v1202
    %v1211 = vmul.f32 %v1204, %v1204
    %v1212 = vadd.f32 %v1208, %v1210
    %v1213 = vadd.f32 %v1209, %v1211
    %1214 = vst [vmem:[#allocation13] sm:$0xff] %v1212
    %1215 = vst [vmem:[#allocation13 + $0x8] sm:$0xff] %v1213
    %v1216 = vpack.c.bf16 %v1212, %v1212
    %v1217 = vpack.c.bf16 %v1213, %v1213
    %v1218 = vld [vmem:[#allocation10] sm:$0xf]
    %v1219 = vld [vmem:[#allocation10 + $0x4] sm:$0xf]
    %v1220 = vld [vmem:[#allocation10 + $0x8] sm:$0xf]
    %v1221 = vld [vmem:[#allocation10 + $0xc] sm:$0xf]
    %v1222 = vld [vmem:[#allocation10 + $0x10] sm:$0xf]
    %v1223 = vld [vmem:[#allocation10 + $0x14] sm:$0xf]
    %v1224 = vld [vmem:[#allocation10 + $0x18] sm:$0xf]
    %v1225 = vld [vmem:[#allocation10 + $0x1c] sm:$0xf]
    %v1226 = vld [vmem:[#allocation10 + $0x20] sm:$0xf]
    %v1227 = vld [vmem:[#allocation10 + $0x24] sm:$0xf]
    %v1228 = vld [vmem:[#allocation10 + $0x28] sm:$0xf]
    %v1229 = vld [vmem:[#allocation10 + $0x2c] sm:$0xf]
    %v1230 = vld [vmem:[#allocation10 + $0x30] sm:$0xf]
    %v1231 = vld [vmem:[#allocation10 + $0x34] sm:$0xf]
    %v1232 = vld [vmem:[#allocation10 + $0x38] sm:$0xf]
    %v1233 = vld [vmem:[#allocation10 + $0x3c] sm:$0xf]
    %v1234 = vld [vmem:[#allocation10 + $0x40] sm:$0xf]
    %v1235 = vld [vmem:[#allocation10 + $0x44] sm:$0xf]
    %v1236 = vld [vmem:[#allocation10 + $0x48] sm:$0xf]
    %v1237 = vld [vmem:[#allocation10 + $0x4c] sm:$0xf]
    %v1238 = vld [vmem:[#allocation10 + $0x50] sm:$0xf]
    %v1239 = vld [vmem:[#allocation10 + $0x54] sm:$0xf]
    %v1240 = vld [vmem:[#allocation10 + $0x58] sm:$0xf]
    %v1241 = vld [vmem:[#allocation10 + $0x5c] sm:$0xf]
    %v1242 = vld [vmem:[#allocation10 + $0x60] sm:$0xf]
    %v1243 = vld [vmem:[#allocation10 + $0x64] sm:$0xf]
    %v1244 = vld [vmem:[#allocation10 + $0x68] sm:$0xf]
    %v1245 = vld [vmem:[#allocation10 + $0x6c] sm:$0xf]
    %v1246 = vld [vmem:[#allocation10 + $0x70] sm:$0xf]
    %v1247 = vld [vmem:[#allocation10 + $0x74] sm:$0xf]
    %v1248 = vld [vmem:[#allocation10 + $0x78] sm:$0xf]
    %v1249 = vld [vmem:[#allocation10 + $0x7c] sm:$0xf]
    %v1282 = vunpack.c.l.b16 %v1218
    %v1283 = vunpack.c.l.b16 %v1219
    %v1284 = vunpack.c.l.b16 %v1220
    %v1285 = vunpack.c.l.b16 %v1221
    %v1286 = vunpack.c.l.b16 %v1222
    %v1287 = vunpack.c.l.b16 %v1223
    %v1288 = vunpack.c.l.b16 %v1224
    %v1289 = vunpack.c.l.b16 %v1225
    %v1290 = vunpack.c.l.b16 %v1226
    %v1291 = vunpack.c.l.b16 %v1227
    %v1292 = vunpack.c.l.b16 %v1228
    %v1293 = vunpack.c.l.b16 %v1229
    %v1294 = vunpack.c.l.b16 %v1230
    %v1295 = vunpack.c.l.b16 %v1231
    %v1296 = vunpack.c.l.b16 %v1232
    %v1297 = vunpack.c.l.b16 %v1233
    %v1298 = vunpack.c.l.b16 %v1234
    %v1299 = vunpack.c.l.b16 %v1235
    %v1300 = vunpack.c.l.b16 %v1236
    %v1301 = vunpack.c.l.b16 %v1237
    %v1302 = vunpack.c.l.b16 %v1238
    %v1303 = vunpack.c.l.b16 %v1239
    %v1304 = vunpack.c.l.b16 %v1240
    %v1305 = vunpack.c.l.b16 %v1241
    %v1306 = vunpack.c.l.b16 %v1242
    %v1307 = vunpack.c.l.b16 %v1243
    %v1308 = vunpack.c.l.b16 %v1244
    %v1309 = vunpack.c.l.b16 %v1245
    %v1310 = vunpack.c.l.b16 %v1246
    %v1311 = vunpack.c.l.b16 %v1247
    %v1312 = vunpack.c.l.b16 %v1248
    %v1313 = vunpack.c.l.b16 %v1249
    %v1314 = vpack.c.b16 %v1283, %v1282
    %v1315 = vpack.c.b16 %v1285, %v1284
    %v1316 = vpack.c.b16 %v1287, %v1286
    %v1317 = vpack.c.b16 %v1289, %v1288
    %v1318 = vpack.c.b16 %v1291, %v1290
    %v1319 = vpack.c.b16 %v1293, %v1292
    %v1320 = vpack.c.b16 %v1295, %v1294
    %v1321 = vpack.c.b16 %v1297, %v1296
    %v1322 = vpack.c.b16 %v1299, %v1298
    %v1323 = vpack.c.b16 %v1301, %v1300
    %v1324 = vpack.c.b16 %v1303, %v1302
    %v1325 = vpack.c.b16 %v1305, %v1304
    %v1326 = vpack.c.b16 %v1307, %v1306
    %v1327 = vpack.c.b16 %v1309, %v1308
    %v1328 = vpack.c.b16 %v1311, %v1310
    %v1329 = vpack.c.b16 %v1313, %v1312
    %1346 = vmatprep.subr.bf16.mxu0 0
    %1347 = vmatpush1.bf16.msra.mxu0 %v1314
    %1348 = vmatprep.subr.bf16.mxu0 0
    %1349 = vmatpush1.bf16.msra.mxu0 %v1315
    %1350 = vmatprep.subr.bf16.mxu0 0
    %1351 = vmatpush1.bf16.msra.mxu0 %v1316
    %1352 = vmatprep.subr.bf16.mxu0 0
    %1353 = vmatpush1.bf16.msra.mxu0 %v1317
    %1354 = vmatprep.subr.bf16.mxu0 0
    %1355 = vmatpush1.bf16.msra.mxu0 %v1318
    %1356 = vmatprep.subr.bf16.mxu0 0
    %1357 = vmatpush1.bf16.msra.mxu0 %v1319
    %1358 = vmatprep.subr.bf16.mxu0 0
    %1359 = vmatpush1.bf16.msra.mxu0 %v1320
    %1360 = vmatprep.subr.bf16.mxu0 0
    %1361 = vmatpush1.bf16.msra.mxu0 %v1321
    %1362 = vmatprep.subr.bf16.mxu0 0
    %1363 = vmatpush1.bf16.msra.mxu0 %v1322
    %1364 = vmatprep.subr.bf16.mxu0 0
    %1365 = vmatpush1.bf16.msra.mxu0 %v1323
    %1366 = vmatprep.subr.bf16.mxu0 0
    %1367 = vmatpush1.bf16.msra.mxu0 %v1324
    %1368 = vmatprep.subr.bf16.mxu0 0
    %1369 = vmatpush1.bf16.msra.mxu0 %v1325
    %1370 = vmatprep.subr.bf16.mxu0 0
    %1371 = vmatpush1.bf16.msra.mxu0 %v1326
    %1372 = vmatprep.subr.bf16.mxu0 0
    %1373 = vmatpush1.bf16.msra.mxu0 %v1327
    %1374 = vmatprep.subr.bf16.mxu0 0
    %1375 = vmatpush1.bf16.msra.mxu0 %v1328
    %1376 = vmatprep.subr.bf16.mxu0 0
    %1377 = vmatpush1.bf16.msra.mxu0 %v1329
    %1378 = vmatprep.mubr.bf16.mxu0 %v1217
    %1379 = vmatmul.mubr.bf16.gmra.mrb[0].mxu0 %v1216
    %v1380 = vpop.f32.mrb[0].mxu0
    %v1381 = vadd.f32 0.0, %v1380
    %v1382 = vpop.f32.mrb[0].mxu0
    %v1383 = vpop.f32.mrb[0].mxu0
    %v1384 = vpop.f32.mrb[0].mxu0
    %1385 = vdwg.mxu0
    %1386 = vst [vmem:[#allocation12] sm:$0xff] %v1381
    // Predicated region
    $region42: #{tpu_custom_call.1} parent=1 // pred_check
      _
    $region43: #{tpu_custom_call.1} parent=1 // pred_check_branch
      %1388 = sbr.rel (0) target = $region45
    $region44: #{tpu_custom_call.1} parent=1 // pred_region
      %s1390 = ssub.s32 128, 128
      %1391 = vsyncadd [#allocation6], %s1390
      %s1393 = sshll.u32 [#allocation12], 4
      %s1394 = int_to_ptr.vmem [resolvable:$true] %s1393
      %1396 = dma.vmem_to_hbm [thread:$0]  %s1394, 128, %s6, [#allocation6]
    $region45: #{tpu_custom_call.1} parent=1 // pred_fallthru
      _
    // Predicated region
    $region46: #{tpu_custom_call.1} parent=1 // pred_check
      _
    $region47: #{tpu_custom_call.1} parent=1 // pred_check_branch
      %1398 = sbr.rel (0) target = $region49
    $region48: #{tpu_custom_call.1} parent=1 // pred_region
      %s1400 = ssub.s32 256, 256
      %1401 = vsyncadd [#allocation14], %s1400
      %s1403 = sshll.u32 [#allocation13], 4
      %s1404 = int_to_ptr.vmem [resolvable:$true] %s1403
      %1406 = dma.vmem_to_hbm [thread:$0]  %s1404, 256, %s7, [#allocation14]
    $region49: #{tpu_custom_call.1} parent=1 // pred_fallthru
      _
    // Predicated region
    $region50: #{tpu_custom_call.1} parent=1 // pred_check
      _
    $region51: #{tpu_custom_call.1} parent=1 // pred_check_branch
      %1408 = sbr.rel (0) target = $region53
    $region52: #{tpu_custom_call.1} parent=1 // pred_region
      %1409 = dma.done [#allocation6], 128
    $region53: #{tpu_custom_call.1} parent=1 // pred_fallthru
      _
    // Predicated region
    $region54: #{tpu_custom_call.1} parent=1 // pred_check
      _
    $region55: #{tpu_custom_call.1} parent=1 // pred_check_branch
      %1411 = sbr.rel (0) target = $region57
    $region56: #{tpu_custom_call.1} parent=1 // pred_region
      %1412 = dma.done [#allocation14], 256
    $region57: #{tpu_custom_call.1} parent=1 // pred_fallthru
      _
    %1413 = vsyncpa [#allocation5], 1
    %1414 = vsyncpa [#allocation8], 1
    %1415 = vsyncpa [#allocation11], 1
    %1416 = vsyncpa [#allocation6], 1
    %1417 = vsyncpa [#allocation14], 1

</llo_original>
